<compile_context>
chip_gen: v6e
topology: v6e:2x2x1
jax: 0.10.0
libtpu: 0.0.40
codegen_flags: <defaults>
</compile_context>

<pallas_src>
import jax
import jax.numpy as jnp
from jax.experimental import pallas as pl
from jax.experimental.pallas import tpu as pltpu

BN_EPS = 1e-5
NEG_SLOPE = 0.2


# ----------------------------------------------------------------------------------
# kernel
# ----------------------------------------------------------------------------------
def _disc2_kernel(x_ref, w1_ref, w2_ref, g2_ref, b2_ref,
                  w3_ref, g3_ref, b3_ref, w4_ref, o_ref):
    N = o_ref.shape[0]

    # --- layer 1: Conv2d(C,64,k=2,s=2) as ONE block-diagonal dot + LeakyReLU --------
    # x_ref: (16N, 16C), row = conv2-output position (conv3-tap p major, conv4-tap q4,
    # batch innermost), lanes = [conv2 tap q2][conv1 im2col (di,dj,c)].
    # w1_ref: (16C, 256) block-diag -> h1 lane block q2 holds the conv1 output at tap q2.
    h1 = jnp.dot(x_ref[...], w1_ref[...], preferred_element_type=jnp.float32)   # (16N,256)
    h1 = jnp.maximum(h1, NEG_SLOPE * h1)
    h1b = h1.astype(jnp.bfloat16)

    # --- layer 2: Conv2d(64,128,k=2,s=2): four K=256 dots into disjoint lane blocks --
    # Block p = conv2 outputs that are conv3-tap p -> h2 is (4N, 4*128), conv3 taps in
    # lanes.  No cross-dot accumulation needed (partial sums never leave the MXU path).
    w2 = w2_ref[...]
    blk = 4 * N
    h2 = jnp.concatenate(
        [jnp.dot(h1b[p * blk:(p + 1) * blk], w2, preferred_element_type=jnp.float32)
         for p in range(4)], axis=1)                                            # (4N, 512)

    # BatchNorm2d(128) over all 16N positions: fold stats over the 4 lane blocks, then
    # one fused normalize/scale/shift pass.  Training-mode (biased variance).
    inv_n2 = 1.0 / (4.0 * h2.shape[0])
    s1 = jnp.sum(h2, axis=0, keepdims=True)                                     # (1, 512)
    s2 = jnp.sum(h2 * h2, axis=0, keepdims=True)
    s1c = s1[:, 0:128] + s1[:, 128:256] + s1[:, 256:384] + s1[:, 384:512]       # (1, 128)
    s2c = s2[:, 0:128] + s2[:, 128:256] + s2[:, 256:384] + s2[:, 384:512]
    mean2 = s1c * inv_n2
    var2 = s2c * inv_n2 - mean2 * mean2
    scale2 = g2_ref[...] * jax.lax.rsqrt(var2 + BN_EPS)
    shift2 = b2_ref[...] - mean2 * scale2
    scale2_4 = jnp.concatenate([scale2, scale2, scale2, scale2], axis=1)        # (1, 512)
    shift2_4 = jnp.concatenate([shift2, shift2, shift2, shift2], axis=1)
    h2 = h2 * scale2_4 + shift2_4
    h2 = jnp.maximum(h2, NEG_SLOPE * h2)
    h2b = h2.astype(jnp.bfloat16)

    # --- layer 3: Conv2d(128,256,k=2,s=2) as ONE K=512 dot + BN + LeakyReLU ----------
    h3 = jnp.dot(h2b, w3_ref[...], preferred_element_type=jnp.float32)          # (4N, 256)
    inv_n3 = 1.0 / h3.shape[0]
    mean3 = jnp.sum(h3, axis=0, keepdims=True) * inv_n3
    ex23 = jnp.sum(h3 * h3, axis=0, keepdims=True) * inv_n3
    var3 = ex23 - mean3 * mean3
    scale3 = g3_ref[...] * jax.lax.rsqrt(var3 + BN_EPS)
    shift3 = b3_ref[...] - mean3 * scale3
    h3 = h3 * scale3 + shift3
    h3 = jnp.maximum(h3, NEG_SLOPE * h3)

    # --- layer 4: Conv2d(256,1,k=2,s=1) on the 2x2 map + Sigmoid ---------------------
    # Cout=1 is degenerate on the MXU -> VPU: per-tap broadcast multiply, lane reduce,
    # then fold the 4 taps (rows are ordered q4*N + n) with 3 slice-adds.
    w4 = w4_ref[...]                                                            # (4, 256)
    s_q = [jnp.sum(h3[q * N:(q + 1) * N] * w4[q:q + 1, :], axis=1, keepdims=True)
           for q in range(4)]                                                   # 4x (N, 1)
    logit = s_q[0] + s_q[1] + s_q[2] + s_q[3]
    o_ref[...] = (1.0 / (1.0 + jnp.exp(-logit))).astype(o_ref.dtype)


# ----------------------------------------------------------------------------------
# weight pre-packing (call ONCE, outside the per-step hot path)
# ----------------------------------------------------------------------------------
def pack_params(params):
    """PyTorch-layout conv weights -> phase-to-lane matmul form used by the kernel."""
    C = params["w1"].shape[1]
    # conv1 -> (4C, 64) matmul, then block-diag over the 4 conv2 taps -> (16C, 256).
    w1m = jnp.transpose(params["w1"], (2, 3, 1, 0)).reshape(4 * C, 64)
    w1_blk = jnp.kron(jnp.eye(4, dtype=w1m.dtype), w1m).astype(jnp.bfloat16)    # (16C, 256)
    # conv2/conv3: stack the 4 taps along the contraction axis.
    w2s = jnp.transpose(params["w2"], (2, 3, 1, 0)).reshape(256, 128).astype(jnp.bfloat16)
    w3s = jnp.transpose(params["w3"], (2, 3, 1, 0)).reshape(512, 256).astype(jnp.bfloat16)
    # conv4 (Cout=1) runs on the VPU in f32: one (1,256) row per conv4 tap q4 = 2a+b.
    w4m = jnp.transpose(params["w4"], (2, 3, 0, 1)).reshape(4, 256).astype(jnp.float32)
    return {
        "w1": w1_blk, "w2": w2s, "w3": w3s, "w4": w4m,
        "g2": params["g2"].reshape(1, 128).astype(jnp.float32),
        "b2": params["b2"].reshape(1, 128).astype(jnp.float32),
        "g3": params["g3"].reshape(1, 256).astype(jnp.float32),
        "b3": params["b3"].reshape(1, 256).astype(jnp.float32),
    }


# ----------------------------------------------------------------------------------
# wrapper
# ----------------------------------------------------------------------------------
def _im2col_phase_lane(x):
    """(N,C,16,16) -> (16N, 16C) phase-to-lane im2col for layer 1 (single transpose).

    H index i = 8*i3 + 4*i2l + 2*a + di, W index j = 8*j3 + 4*j2l + 2*b + dj, where
    (a,b)=conv2 tap, (di,dj)=conv1 tap, (i2l,j2l)=conv3 tap p, (i3,j3)=conv4 tap q4.
    row  = p*4N + q4*N + n          (conv3-tap major, batch innermost)
    lane = (2a+b)*4C + (2di+dj)*C + c
    """
    N, C, _, _ = x.shape
    x10 = x.reshape(N, C, 2, 2, 2, 2, 2, 2, 2, 2)
    #               n  c  i3 i2l a  di j3 j2l b  dj
    #               0  1  2  3   4  5  6  7   8  9
    xt = jnp.transpose(x10, (3, 7, 2, 6, 0, 4, 8, 5, 9, 1))
    return xt.reshape(16 * N, 16 * C)


def lapgan_discriminator_level2(x_nchw, packed):
    """x_nchw: (N, C, 16, 16) f32, packed = pack_params(params) -> (N, 1) sigmoid scores."""
    N, C, H, W = x_nchw.shape
    assert H == 16 and W == 16, "three stride-2 2x2 convs + a final 2x2 conv imply 16x16"

    x_l1 = _im2col_phase_lane(x_nchw).astype(jnp.bfloat16)

    args = (x_l1, packed["w1"], packed["w2"], packed["g2"], packed["b2"],
            packed["w3"], packed["g3"], packed["b3"], packed["w4"])

    R1, R2 = 16 * N, 4 * N
    flops = 2 * (R1 * 16 * C * 256      # layer 1 (block-diag, incl. structural zeros)
                 + R1 * 256 * 128       # layer 2
                 + R2 * 512 * 256       # layer 3
                 + R2 * 256)            # layer 4 (VPU)
    bytes_accessed = sum(int(a.size) * a.dtype.itemsize for a in args) + N * 4
    cost = pl.CostEstimate(flops=flops, transcendentals=128 + 256 + N,
                           bytes_accessed=bytes_accessed)

    # Everything fits in VMEM at these sizes -> no grid, one resident block per operand.
    return pl.pallas_call(
        _disc2_kernel,
        out_shape=jax.ShapeDtypeStruct((N, 1), jnp.float32),
        in_specs=[pl.BlockSpec(memory_space=pltpu.VMEM) for _ in args],
        out_specs=pl.BlockSpec(memory_space=pltpu.VMEM),
        cost_estimate=cost,
    )(*args)


# ----------------------------------------------------------------------------------
# parameters + pure-JAX reference
# ----------------------------------------------------------------------------------
def init_params(key, channels):
    """Synthetic parameters in PyTorch layout: conv weights (Cout, Cin, 2, 2), bias=False."""
    ks = jax.random.split(key, 8)
    w = lambda k, co, ci: 0.05 * jax.random.normal(k, (co, ci, 2, 2), jnp.float32)
    return {
        "w1": w(ks[0], 64, channels),
        "w2": w(ks[1], 128, 64),
        "g2": 1.0 + 0.1 * jax.random.normal(ks[2], (128,), jnp.float32),
        "b2": 0.1 * jax.random.normal(ks[3], (128,), jnp.float32),
        "w3": w(ks[4], 256, 128),
        "g3": 1.0 + 0.1 * jax.random.normal(ks[5], (256,), jnp.float32),
        "b3": 0.1 * jax.random.normal(ks[6], (256,), jnp.float32),
        "w4": w(ks[7], 1, 256),
    }


def reference_forward(x, params):
    """Pure-JAX (lax.conv) reference of the PyTorch forward (training-mode BN).

    Conv1-3 inputs are cast to bf16 (f32 accumulation) to mirror the kernel's MXU
    precision; BN/activation math stays f32; conv4 stays f32 (tiny, VPU in the kernel).
    """
    dn = ("NCHW", "OIHW", "NCHW")

    def conv(h, w, stride, low_precision=True):
        prec = None if low_precision else jax.lax.Precision.HIGHEST
        if low_precision:
            h, w = h.astype(jnp.bfloat16), w.astype(jnp.bfloat16)
        return jax.lax.conv_general_dilated(
            h, w, window_strides=(stride, stride), padding="VALID",
            dimension_numbers=dn, preferred_element_type=jnp.float32, precision=prec)

    def bn(h, g, b):
        m = jnp.mean(h, axis=(0, 2, 3), keepdims=True)
        v = jnp.mean((h - m) ** 2, axis=(0, 2, 3), keepdims=True)   # biased variance
        return (h - m) / jnp.sqrt(v + BN_EPS) * g.reshape(1, -1, 1, 1) + b.reshape(1, -1, 1, 1)

    lrelu = lambda h: jnp.maximum(h, NEG_SLOPE * h)

    h = lrelu(conv(x, params["w1"], 2))
    h = lrelu(bn(conv(h, params["w2"], 2), params["g2"], params["b2"]))
    h = lrelu(bn(conv(h, params["w3"], 2), params["g3"], params["b3"]))
    h = conv(h, params["w4"], 1, low_precision=False)
    return jax.nn.sigmoid(h).reshape(-1, 1)                         # == .view(-1, 1)


if __name__ == "__main__":
    key = jax.random.PRNGKey(0)
    k_x, k_p = jax.random.split(key)

    N, C, H, W = 2, 4, 16, 16
    x = jax.random.normal(k_x, (N, C, H, W), jnp.float32)
    params = init_params(k_p, C)

    packed = pack_params(params)                   # pack weights ONCE, outside the hot path
    fwd = jax.jit(lapgan_discriminator_level2)
    out = jax.block_until_ready(fwd(x, packed))

    ref = reference_forward(x, params)
    assert out.shape == (N, 1)
    assert bool(jnp.all(jnp.isfinite(out)))
    # Tolerance covers bf16-matmul accumulation-order noise (both paths use bf16 MXU math).
    assert jnp.allclose(out, ref, atol=1e-3, rtol=1e-3), (out, ref)

    print("KERNEL_OK")
</pallas_src>

<mosaic_0001>
module attributes {stable_mosaic.version = 11 : i64} {
  func.func @_disc2_kernel(%arg0: memref<32x64xbf16, #tpu.memory_space<vmem>>, %arg1: memref<64x256xbf16, #tpu.memory_space<vmem>>, %arg2: memref<256x128xbf16, #tpu.memory_space<vmem>>, %arg3: memref<1x128xf32, #tpu.memory_space<vmem>>, %arg4: memref<1x128xf32, #tpu.memory_space<vmem>>, %arg5: memref<512x256xbf16, #tpu.memory_space<vmem>>, %arg6: memref<1x256xf32, #tpu.memory_space<vmem>>, %arg7: memref<1x256xf32, #tpu.memory_space<vmem>>, %arg8: memref<4x256xf32, #tpu.memory_space<vmem>>, %arg9: memref<2x1xf32, #tpu.memory_space<vmem>>) attributes {dimension_semantics = [], scalar_prefetch = 0 : i64, scratch_operands = 0 : i64, tpu.core_type = #tpu.core_type<tc>} {
    %c0 = arith.constant 0 : index
    %c0_0 = arith.constant 0 : index
    %0 = vector.load %arg0[%c0, %c0_0] : memref<32x64xbf16, #tpu.memory_space<vmem>>, vector<32x64xbf16>
    %c0_1 = arith.constant 0 : index
    %c0_2 = arith.constant 0 : index
    %1 = vector.load %arg1[%c0_1, %c0_2] : memref<64x256xbf16, #tpu.memory_space<vmem>>, vector<64x256xbf16>
    %cst = arith.constant dense<0.000000e+00> : vector<32x256xf32>
    %2 = tpu.matmul %0, %1, %cst {dimension_numbers = #tpu.dot_dimension_numbers<[1], [0], [0], [1], [0, 0, 1, 1], [], []>} : vector<32x64xbf16>, vector<64x256xbf16>, vector<32x256xf32> -> vector<32x256xf32>
    %cst_3 = arith.constant 2.000000e-01 : f32
    %3 = vector.broadcast %cst_3 : f32 to vector<32x256xf32>
    %4 = arith.mulf %3, %2 : vector<32x256xf32>
    %5 = arith.maximumf %2, %4 : vector<32x256xf32>
    %6 = arith.truncf %5 : vector<32x256xf32> to vector<32x256xbf16>
    %c0_4 = arith.constant 0 : index
    %c0_5 = arith.constant 0 : index
    %7 = vector.load %arg2[%c0_4, %c0_5] : memref<256x128xbf16, #tpu.memory_space<vmem>>, vector<256x128xbf16>
    %8 = vector.extract_strided_slice %6 {offsets = [0, 0], sizes = [8, 256], strides = [1, 1]} : vector<32x256xbf16> to vector<8x256xbf16>
    %cst_6 = arith.constant dense<0.000000e+00> : vector<8x128xf32>
    %9 = tpu.matmul %8, %7, %cst_6 {dimension_numbers = #tpu.dot_dimension_numbers<[1], [0], [0], [1], [0, 0, 1, 1], [], []>} : vector<8x256xbf16>, vector<256x128xbf16>, vector<8x128xf32> -> vector<8x128xf32>
    %10 = vector.extract_strided_slice %6 {offsets = [8, 0], sizes = [8, 256], strides = [1, 1]} : vector<32x256xbf16> to vector<8x256xbf16>
    %cst_7 = arith.constant dense<0.000000e+00> : vector<8x128xf32>
    %11 = tpu.matmul %10, %7, %cst_7 {dimension_numbers = #tpu.dot_dimension_numbers<[1], [0], [0], [1], [0, 0, 1, 1], [], []>} : vector<8x256xbf16>, vector<256x128xbf16>, vector<8x128xf32> -> vector<8x128xf32>
    %12 = vector.extract_strided_slice %6 {offsets = [16, 0], sizes = [8, 256], strides = [1, 1]} : vector<32x256xbf16> to vector<8x256xbf16>
    %cst_8 = arith.constant dense<0.000000e+00> : vector<8x128xf32>
    %13 = tpu.matmul %12, %7, %cst_8 {dimension_numbers = #tpu.dot_dimension_numbers<[1], [0], [0], [1], [0, 0, 1, 1], [], []>} : vector<8x256xbf16>, vector<256x128xbf16>, vector<8x128xf32> -> vector<8x128xf32>
    %14 = vector.extract_strided_slice %6 {offsets = [24, 0], sizes = [8, 256], strides = [1, 1]} : vector<32x256xbf16> to vector<8x256xbf16>
    %cst_9 = arith.constant dense<0.000000e+00> : vector<8x128xf32>
    %15 = tpu.matmul %14, %7, %cst_9 {dimension_numbers = #tpu.dot_dimension_numbers<[1], [0], [0], [1], [0, 0, 1, 1], [], []>} : vector<8x256xbf16>, vector<256x128xbf16>, vector<8x128xf32> -> vector<8x128xf32>
    %16 = tpu.concatenate %9, %11, %13, %15 in 1 : vector<8x128xf32>, vector<8x128xf32>, vector<8x128xf32>, vector<8x128xf32> -> vector<8x512xf32>
    %cst_10 = arith.constant dense<0.000000e+00> : vector<512xf32>
    %17 = vector.multi_reduction <add>, %16, %cst_10 [0] : vector<8x512xf32> to vector<512xf32>
    %18 = vector.shape_cast %17 : vector<512xf32> to vector<1x512xf32>
    %19 = arith.mulf %16, %16 : vector<8x512xf32>
    %cst_11 = arith.constant dense<0.000000e+00> : vector<512xf32>
    %20 = vector.multi_reduction <add>, %19, %cst_11 [0] : vector<8x512xf32> to vector<512xf32>
    %21 = vector.shape_cast %20 : vector<512xf32> to vector<1x512xf32>
    %22 = vector.extract_strided_slice %18 {offsets = [0, 0], sizes = [1, 128], strides = [1, 1]} : vector<1x512xf32> to vector<1x128xf32>
    %23 = vector.extract_strided_slice %18 {offsets = [0, 128], sizes = [1, 128], strides = [1, 1]} : vector<1x512xf32> to vector<1x128xf32>
    %24 = arith.addf %22, %23 : vector<1x128xf32>
    %25 = vector.extract_strided_slice %18 {offsets = [0, 256], sizes = [1, 128], strides = [1, 1]} : vector<1x512xf32> to vector<1x128xf32>
    %26 = arith.addf %24, %25 : vector<1x128xf32>
    %27 = vector.extract_strided_slice %18 {offsets = [0, 384], sizes = [1, 128], strides = [1, 1]} : vector<1x512xf32> to vector<1x128xf32>
    %28 = arith.addf %26, %27 : vector<1x128xf32>
    %29 = vector.extract_strided_slice %21 {offsets = [0, 0], sizes = [1, 128], strides = [1, 1]} : vector<1x512xf32> to vector<1x128xf32>
    %30 = vector.extract_strided_slice %21 {offsets = [0, 128], sizes = [1, 128], strides = [1, 1]} : vector<1x512xf32> to vector<1x128xf32>
    %31 = arith.addf %29, %30 : vector<1x128xf32>
    %32 = vector.extract_strided_slice %21 {offsets = [0, 256], sizes = [1, 128], strides = [1, 1]} : vector<1x512xf32> to vector<1x128xf32>
    %33 = arith.addf %31, %32 : vector<1x128xf32>
    %34 = vector.extract_strided_slice %21 {offsets = [0, 384], sizes = [1, 128], strides = [1, 1]} : vector<1x512xf32> to vector<1x128xf32>
    %35 = arith.addf %33, %34 : vector<1x128xf32>
    %cst_12 = arith.constant 3.125000e-02 : f32
    %36 = vector.broadcast %cst_12 : f32 to vector<1x128xf32>
    %37 = arith.mulf %28, %36 : vector<1x128xf32>
    %cst_13 = arith.constant 3.125000e-02 : f32
    %38 = vector.broadcast %cst_13 : f32 to vector<1x128xf32>
    %39 = arith.mulf %35, %38 : vector<1x128xf32>
    %40 = arith.mulf %37, %37 : vector<1x128xf32>
    %41 = arith.subf %39, %40 : vector<1x128xf32>
    %c0_14 = arith.constant 0 : index
    %c0_15 = arith.constant 0 : index
    %42 = vector.load %arg3[%c0_14, %c0_15] : memref<1x128xf32, #tpu.memory_space<vmem>>, vector<1x128xf32>
    %cst_16 = arith.constant 9.99999974E-6 : f32
    %43 = vector.broadcast %cst_16 : f32 to vector<1x128xf32>
    %44 = arith.addf %41, %43 : vector<1x128xf32>
    %45 = math.rsqrt %44 : vector<1x128xf32>
    %46 = arith.mulf %42, %45 : vector<1x128xf32>
    %c0_17 = arith.constant 0 : index
    %c0_18 = arith.constant 0 : index
    %47 = vector.load %arg4[%c0_17, %c0_18] : memref<1x128xf32, #tpu.memory_space<vmem>>, vector<1x128xf32>
    %48 = arith.mulf %37, %46 : vector<1x128xf32>
    %49 = arith.subf %47, %48 : vector<1x128xf32>
    %50 = tpu.concatenate %46, %46, %46, %46 in 1 : vector<1x128xf32>, vector<1x128xf32>, vector<1x128xf32>, vector<1x128xf32> -> vector<1x512xf32>
    %51 = tpu.concatenate %49, %49, %49, %49 in 1 : vector<1x128xf32>, vector<1x128xf32>, vector<1x128xf32>, vector<1x128xf32> -> vector<1x512xf32>
    %52 = vector.broadcast %50 : vector<1x512xf32> to vector<8x512xf32>
    %53 = arith.mulf %16, %52 : vector<8x512xf32>
    %54 = vector.broadcast %51 : vector<1x512xf32> to vector<8x512xf32>
    %55 = arith.addf %53, %54 : vector<8x512xf32>
    %cst_19 = arith.constant 2.000000e-01 : f32
    %56 = vector.broadcast %cst_19 : f32 to vector<8x512xf32>
    %57 = arith.mulf %56, %55 : vector<8x512xf32>
    %58 = arith.maximumf %55, %57 : vector<8x512xf32>
    %59 = arith.truncf %58 : vector<8x512xf32> to vector<8x512xbf16>
    %c0_20 = arith.constant 0 : index
    %c0_21 = arith.constant 0 : index
    %60 = vector.load %arg5[%c0_20, %c0_21] : memref<512x256xbf16, #tpu.memory_space<vmem>>, vector<512x256xbf16>
    %cst_22 = arith.constant dense<0.000000e+00> : vector<8x256xf32>
    %61 = tpu.matmul %59, %60, %cst_22 {dimension_numbers = #tpu.dot_dimension_numbers<[1], [0], [0], [1], [0, 0, 1, 1], [], []>} : vector<8x512xbf16>, vector<512x256xbf16>, vector<8x256xf32> -> vector<8x256xf32>
    %cst_23 = arith.constant dense<0.000000e+00> : vector<256xf32>
    %62 = vector.multi_reduction <add>, %61, %cst_23 [0] : vector<8x256xf32> to vector<256xf32>
    %63 = vector.shape_cast %62 : vector<256xf32> to vector<1x256xf32>
    %cst_24 = arith.constant 1.250000e-01 : f32
    %64 = vector.broadcast %cst_24 : f32 to vector<1x256xf32>
    %65 = arith.mulf %63, %64 : vector<1x256xf32>
    %66 = arith.mulf %61, %61 : vector<8x256xf32>
    %cst_25 = arith.constant dense<0.000000e+00> : vector<256xf32>
    %67 = vector.multi_reduction <add>, %66, %cst_25 [0] : vector<8x256xf32> to vector<256xf32>
    %68 = vector.shape_cast %67 : vector<256xf32> to vector<1x256xf32>
    %cst_26 = arith.constant 1.250000e-01 : f32
    %69 = vector.broadcast %cst_26 : f32 to vector<1x256xf32>
    %70 = arith.mulf %68, %69 : vector<1x256xf32>
    %71 = arith.mulf %65, %65 : vector<1x256xf32>
    %72 = arith.subf %70, %71 : vector<1x256xf32>
    %c0_27 = arith.constant 0 : index
    %c0_28 = arith.constant 0 : index
    %73 = vector.load %arg6[%c0_27, %c0_28] : memref<1x256xf32, #tpu.memory_space<vmem>>, vector<1x256xf32>
    %cst_29 = arith.constant 9.99999974E-6 : f32
    %74 = vector.broadcast %cst_29 : f32 to vector<1x256xf32>
    %75 = arith.addf %72, %74 : vector<1x256xf32>
    %76 = math.rsqrt %75 : vector<1x256xf32>
    %77 = arith.mulf %73, %76 : vector<1x256xf32>
    %c0_30 = arith.constant 0 : index
    %c0_31 = arith.constant 0 : index
    %78 = vector.load %arg7[%c0_30, %c0_31] : memref<1x256xf32, #tpu.memory_space<vmem>>, vector<1x256xf32>
    %79 = arith.mulf %65, %77 : vector<1x256xf32>
    %80 = arith.subf %78, %79 : vector<1x256xf32>
    %81 = vector.broadcast %77 : vector<1x256xf32> to vector<8x256xf32>
    %82 = arith.mulf %61, %81 : vector<8x256xf32>
    %83 = vector.broadcast %80 : vector<1x256xf32> to vector<8x256xf32>
    %84 = arith.addf %82, %83 : vector<8x256xf32>
    %cst_32 = arith.constant 2.000000e-01 : f32
    %85 = vector.broadcast %cst_32 : f32 to vector<8x256xf32>
    %86 = arith.mulf %85, %84 : vector<8x256xf32>
    %87 = arith.maximumf %84, %86 : vector<8x256xf32>
    %c0_33 = arith.constant 0 : index
    %c0_34 = arith.constant 0 : index
    %88 = vector.load %arg8[%c0_33, %c0_34] : memref<4x256xf32, #tpu.memory_space<vmem>>, vector<4x256xf32>
    %89 = vector.extract_strided_slice %87 {offsets = [0, 0], sizes = [2, 256], strides = [1, 1]} : vector<8x256xf32> to vector<2x256xf32>
    %90 = vector.extract_strided_slice %88 {offsets = [0, 0], sizes = [1, 256], strides = [1, 1]} : vector<4x256xf32> to vector<1x256xf32>
    %91 = vector.broadcast %90 : vector<1x256xf32> to vector<2x256xf32>
    %92 = arith.mulf %89, %91 : vector<2x256xf32>
    %cst_35 = arith.constant dense<0.000000e+00> : vector<2xf32>
    %93 = vector.multi_reduction <add>, %92, %cst_35 [1] : vector<2x256xf32> to vector<2xf32>
    %94 = vector.shape_cast %93 : vector<2xf32> to vector<2x1xf32>
    %95 = vector.extract_strided_slice %87 {offsets = [2, 0], sizes = [2, 256], strides = [1, 1]} : vector<8x256xf32> to vector<2x256xf32>
    %96 = vector.extract_strided_slice %88 {offsets = [1, 0], sizes = [1, 256], strides = [1, 1]} : vector<4x256xf32> to vector<1x256xf32>
    %97 = vector.broadcast %96 : vector<1x256xf32> to vector<2x256xf32>
    %98 = arith.mulf %95, %97 : vector<2x256xf32>
    %cst_36 = arith.constant dense<0.000000e+00> : vector<2xf32>
    %99 = vector.multi_reduction <add>, %98, %cst_36 [1] : vector<2x256xf32> to vector<2xf32>
    %100 = vector.shape_cast %99 : vector<2xf32> to vector<2x1xf32>
    %101 = vector.extract_strided_slice %87 {offsets = [4, 0], sizes = [2, 256], strides = [1, 1]} : vector<8x256xf32> to vector<2x256xf32>
    %102 = vector.extract_strided_slice %88 {offsets = [2, 0], sizes = [1, 256], strides = [1, 1]} : vector<4x256xf32> to vector<1x256xf32>
    %103 = vector.broadcast %102 : vector<1x256xf32> to vector<2x256xf32>
    %104 = arith.mulf %101, %103 : vector<2x256xf32>
    %cst_37 = arith.constant dense<0.000000e+00> : vector<2xf32>
    %105 = vector.multi_reduction <add>, %104, %cst_37 [1] : vector<2x256xf32> to vector<2xf32>
    %106 = vector.shape_cast %105 : vector<2xf32> to vector<2x1xf32>
    %107 = vector.extract_strided_slice %87 {offsets = [6, 0], sizes = [2, 256], strides = [1, 1]} : vector<8x256xf32> to vector<2x256xf32>
    %108 = vector.extract_strided_slice %88 {offsets = [3, 0], sizes = [1, 256], strides = [1, 1]} : vector<4x256xf32> to vector<1x256xf32>
    %109 = vector.broadcast %108 : vector<1x256xf32> to vector<2x256xf32>
    %110 = arith.mulf %107, %109 : vector<2x256xf32>
    %cst_38 = arith.constant dense<0.000000e+00> : vector<2xf32>
    %111 = vector.multi_reduction <add>, %110, %cst_38 [1] : vector<2x256xf32> to vector<2xf32>
    %112 = vector.shape_cast %111 : vector<2xf32> to vector<2x1xf32>
    %113 = arith.addf %94, %100 : vector<2x1xf32>
    %114 = arith.addf %113, %106 : vector<2x1xf32>
    %115 = arith.addf %114, %112 : vector<2x1xf32>
    %cst_39 = arith.constant 0.000000e+00 : f32
    %116 = vector.broadcast %cst_39 : f32 to vector<2x1xf32>
    %117 = arith.subf %116, %115 : vector<2x1xf32>
    %118 = math.exp %117 : vector<2x1xf32>
    %cst_40 = arith.constant 1.000000e+00 : f32
    %119 = vector.broadcast %cst_40 : f32 to vector<2x1xf32>
    %120 = arith.addf %119, %118 : vector<2x1xf32>
    %cst_41 = arith.constant 1.000000e+00 : f32
    %121 = vector.broadcast %cst_41 : f32 to vector<2x1xf32>
    %122 = arith.divf %121, %120 : vector<2x1xf32>
    %c0_42 = arith.constant 0 : index
    %c0_43 = arith.constant 0 : index
    %123 = vector.load %arg9[%c0_42, %c0_43] : memref<2x1xf32, #tpu.memory_space<vmem>>, vector<2x1xf32>
    tpu.vector_store %arg9[%c0_42, %c0_43], %122 {strides = array<i32>} : memref<2x1xf32, #tpu.memory_space<vmem>>, vector<2x1xf32>,
    return
  }
}

</mosaic_0001>

<llo_original>
// kernel: lapgan_discriminator_level2.1
$region0: #{lapgan_discriminator_level2.1}
  #allocation0 [shape = 'u32[]', space=smem, size = 0x4, offset = 0x4, fixed_abs, tag = 'smem constant byte address 0x4 - core index']
  #allocation1 [shape = 'u32[144,128]{1,0:T(1,128)}', space=vmem, size = 0x12000, scoped, tag = 'internal scratch']
  %s0 = inlined_call_operand.vmem [shape: bf16[32,64], index: 0, kind: input, shape index: {}]
  %s1 = inlined_call_operand.vmem [shape: bf16[64,256], index: 1, kind: input, shape index: {}]
  %s2 = inlined_call_operand.vmem [shape: bf16[256,128], index: 2, kind: input, shape index: {}]
  %s3 = inlined_call_operand.vmem [shape: f32[1,128], index: 3, kind: input, shape index: {}]
  %s4 = inlined_call_operand.vmem [shape: f32[1,128], index: 4, kind: input, shape index: {}]
  %s5 = inlined_call_operand.vmem [shape: bf16[512,256], index: 5, kind: input, shape index: {}]
  %s6 = inlined_call_operand.vmem [shape: f32[1,256], index: 6, kind: input, shape index: {}]
  %s7 = inlined_call_operand.vmem [shape: f32[1,256], index: 7, kind: input, shape index: {}]
  %s8 = inlined_call_operand.vmem [shape: f32[4,256], index: 8, kind: input, shape index: {}]
  %s9 = inlined_call_operand.vmem [shape: f32[2,1], index: 9, kind: output, shape index: {}]
  %s10 = sld [smem:[#allocation0]]
  $region46: #{lapgan_discriminator_level2.1} parent=0
    _
  %s12 = ssub.s32 1, %s10
  %s13 = scalar_select 0, %s12, %s10
  // Predicated region
  $region2: #{lapgan_discriminator_level2.1} parent=0 // pred_check
    _
  $region3: #{lapgan_discriminator_level2.1} parent=0 // pred_check_branch
    %15 = sbr.rel (0) target = $region5
  $region4: #{lapgan_discriminator_level2.1} parent=0 // pred_region
    _
  $region5: #{lapgan_discriminator_level2.1} parent=0 // pred_fallthru
    _
  // Predicated region
  $region6: #{lapgan_discriminator_level2.1} parent=0 // pred_check
    _
  $region7: #{lapgan_discriminator_level2.1} parent=0 // pred_check_branch
    %17 = sbr.rel (0) target = $region9
  $region8: #{lapgan_discriminator_level2.1} parent=0 // pred_region
    _
  $region9: #{lapgan_discriminator_level2.1} parent=0 // pred_fallthru
    _
  // Predicated region
  $region10: #{lapgan_discriminator_level2.1} parent=0 // pred_check
    _
  $region11: #{lapgan_discriminator_level2.1} parent=0 // pred_check_branch
    %19 = sbr.rel (0) target = $region13
  $region12: #{lapgan_discriminator_level2.1} parent=0 // pred_region
    _
  $region13: #{lapgan_discriminator_level2.1} parent=0 // pred_fallthru
    _
  // Predicated region
  $region14: #{lapgan_discriminator_level2.1} parent=0 // pred_check
    _
  $region15: #{lapgan_discriminator_level2.1} parent=0 // pred_check_branch
    %21 = sbr.rel (0) target = $region17
  $region16: #{lapgan_discriminator_level2.1} parent=0 // pred_region
    _
  $region17: #{lapgan_discriminator_level2.1} parent=0 // pred_fallthru
    _
  // Predicated region
  $region18: #{lapgan_discriminator_level2.1} parent=0 // pred_check
    _
  $region19: #{lapgan_discriminator_level2.1} parent=0 // pred_check_branch
    %23 = sbr.rel (0) target = $region21
  $region20: #{lapgan_discriminator_level2.1} parent=0 // pred_region
    _
  $region21: #{lapgan_discriminator_level2.1} parent=0 // pred_fallthru
    _
  // Predicated region
  $region22: #{lapgan_discriminator_level2.1} parent=0 // pred_check
    _
  $region23: #{lapgan_discriminator_level2.1} parent=0 // pred_check_branch
    %25 = sbr.rel (0) target = $region25
  $region24: #{lapgan_discriminator_level2.1} parent=0 // pred_region
    _
  $region25: #{lapgan_discriminator_level2.1} parent=0 // pred_fallthru
    _
  // Predicated region
  $region26: #{lapgan_discriminator_level2.1} parent=0 // pred_check
    _
  $region27: #{lapgan_discriminator_level2.1} parent=0 // pred_check_branch
    %27 = sbr.rel (0) target = $region29
  $region28: #{lapgan_discriminator_level2.1} parent=0 // pred_region
    _
  $region29: #{lapgan_discriminator_level2.1} parent=0 // pred_fallthru
    _
  // Predicated region
  $region30: #{lapgan_discriminator_level2.1} parent=0 // pred_check
    _
  $region31: #{lapgan_discriminator_level2.1} parent=0 // pred_check_branch
    %29 = sbr.rel (0) target = $region33
  $region32: #{lapgan_discriminator_level2.1} parent=0 // pred_region
    _
  $region33: #{lapgan_discriminator_level2.1} parent=0 // pred_fallthru
    _
  // Predicated region
  $region34: #{lapgan_discriminator_level2.1} parent=0 // pred_check
    _
  $region35: #{lapgan_discriminator_level2.1} parent=0 // pred_check_branch
    %31 = sbr.rel (0) target = $region37
  $region36: #{lapgan_discriminator_level2.1} parent=0 // pred_region
    _
  $region37: #{lapgan_discriminator_level2.1} parent=0 // pred_fallthru
    _
  %v33 = vld [vmem:[%s0] sm:$0xf]
  %v34 = vld [vmem:[%s0 + $0x4] sm:$0xf]
  %v35 = vld [vmem:[%s0 + $0x8] sm:$0xf]
  %v36 = vld [vmem:[%s0 + $0xc] sm:$0xf]
  %v37 = vld [vmem:[%s1] sm:$0xff]
  %v38 = vld [vmem:[%s1 + $0x8] sm:$0xff]
  %v39 = vld [vmem:[%s1 + $0x10] sm:$0xff]
  %v40 = vld [vmem:[%s1 + $0x18] sm:$0xff]
  %v41 = vld [vmem:[%s1 + $0x20] sm:$0xff]
  %v42 = vld [vmem:[%s1 + $0x28] sm:$0xff]
  %v43 = vld [vmem:[%s1 + $0x30] sm:$0xff]
  %v44 = vld [vmem:[%s1 + $0x38] sm:$0xff]
  %v49 = vunpack.c.l.b16 %v33
  %v50 = vunpack.c.l.b16 %v34
  %v51 = vunpack.c.l.b16 %v35
  %v52 = vunpack.c.l.b16 %v36
  %v53 = vpack.c.b16 %v50, %v49
  %v54 = vpack.c.b16 %v52, %v51
  %v63 = vunpack.c.l.b16 %v37
  %v64 = vunpack.c.h.b16 %v37
  %v65 = vunpack.c.l.b16 %v38
  %v66 = vunpack.c.h.b16 %v38
  %v67 = vunpack.c.l.b16 %v39
  %v68 = vunpack.c.h.b16 %v39
  %v69 = vunpack.c.l.b16 %v40
  %v70 = vunpack.c.h.b16 %v40
  %v71 = vunpack.c.l.b16 %v41
  %v72 = vunpack.c.h.b16 %v41
  %v73 = vunpack.c.l.b16 %v42
  %v74 = vunpack.c.h.b16 %v42
  %v75 = vunpack.c.l.b16 %v43
  %v76 = vunpack.c.h.b16 %v43
  %v77 = vunpack.c.l.b16 %v44
  %v78 = vunpack.c.h.b16 %v44
  %v79 = vpack.c.b16 %v65, %v63
  %v80 = vpack.c.b16 %v66, %v64
  %v81 = vpack.c.b16 %v69, %v67
  %v82 = vpack.c.b16 %v70, %v68
  %v83 = vpack.c.b16 %v73, %v71
  %v84 = vpack.c.b16 %v74, %v72
  %v85 = vpack.c.b16 %v77, %v75
  %v86 = vpack.c.b16 %v78, %v76
  %vm95 = vcmask 523264
  %v97 = vsel %vm95, %v53, 0
  %v100 = vsel %vm95, %v54, 0
  %102 = vmatprep.subr.bf16.mxu0 0
  %103 = vmatpush1.bf16.msra.mxu0 0
  %104 = vmatprep.subr.bf16.mxu0 0
  %105 = vmatpush1.bf16.msra.mxu0 0
  %106 = vmatprep.subr.bf16.mxu0 0
  %107 = vmatpush1.bf16.msra.mxu0 0
  %108 = vmatprep.subr.bf16.mxu0 0
  %109 = vmatpush1.bf16.msra.mxu0 0
  %110 = vmatprep.subr.bf16.mxu0 %v86
  %111 = vmatpush1.bf16.msra.mxu0 %v85
  %112 = vmatprep.subr.bf16.mxu0 %v84
  %113 = vmatpush1.bf16.msra.mxu0 %v83
  %114 = vmatprep.subr.bf16.mxu0 %v82
  %115 = vmatpush1.bf16.msra.mxu0 %v81
  %116 = vmatprep.subr.bf16.mxu0 %v80
  %117 = vmatpush1.bf16.msra.mxu0 %v79
  %118 = vmatprep.subr.bf16.mxu0 0
  %119 = vmatpush2.bf16.msra.mxu0 0
  %120 = vmatprep.subr.bf16.mxu0 0
  %121 = vmatpush2.bf16.msra.mxu0 0
  %122 = vmatprep.subr.bf16.mxu0 0
  %123 = vmatpush2.bf16.msra.mxu0 0
  %124 = vmatprep.subr.bf16.mxu0 0
  %125 = vmatpush2.bf16.msra.mxu0 0
  %126 = vmatprep.subr.bf16.mxu0 0
  %127 = vmatpush2.bf16.msra.mxu0 0
  %128 = vmatprep.subr.bf16.mxu0 0
  %129 = vmatpush2.bf16.msra.mxu0 0
  %130 = vmatprep.subr.bf16.mxu0 0
  %131 = vmatpush2.bf16.msra.mxu0 0
  %132 = vmatprep.subr.bf16.mxu0 0
  %133 = vmatpush2.bf16.msra.mxu0 0
  %134 = vmatprep.mubr.bf16.mxu0 0
  %135 = vmatmul.mubr.bf16.gmra.mxu0 %v97
  %v136 = vpop.f32.mrf.mxu0
  %v137 = vadd.f32 0.0, %v136
  %v138 = vpop.f32.mrf.mxu0
  %v139 = vadd.f32 0.0, %v138
  %v140 = vpop.f32.mrf.mxu0
  %v141 = vadd.f32 0.0, %v140
  %v142 = vpop.f32.mrf.mxu0
  %v143 = vadd.f32 0.0, %v142
  %144 = vmatprep.mubr.bf16.mxu0 0
  %145 = vmatmul.mubr.bf16.gmra.mxu0 %v100
  %v146 = vpop.f32.mrf.mxu0
  %v147 = vadd.f32 0.0, %v146
  %v148 = vpop.f32.mrf.mxu0
  %v149 = vadd.f32 0.0, %v148
  %v150 = vpop.f32.mrf.mxu0
  %v151 = vadd.f32 0.0, %v150
  %v152 = vpop.f32.mrf.mxu0
  %v153 = vadd.f32 0.0, %v152
  %154 = vdwg.mxu0
  %v155 = vmul.f32 %v137, 0.2
  %v156 = vmul.f32 %v139, 0.2
  %v157 = vmul.f32 %v141, 0.2
  %v158 = vmul.f32 %v143, 0.2
  %v159 = vmul.f32 %v147, 0.2
  %v160 = vmul.f32 %v149, 0.2
  %v161 = vmul.f32 %v151, 0.2
  %v162 = vmul.f32 %v153, 0.2
  %v163 = vmax.f32 %v137, %v155
  %v164 = vmax.f32 %v139, %v156
  %v165 = vmax.f32 %v141, %v157
  %v166 = vmax.f32 %v143, %v158
  %v167 = vmax.f32 %v147, %v159
  %v168 = vmax.f32 %v149, %v160
  %v169 = vmax.f32 %v151, %v161
  %v170 = vmax.f32 %v153, %v162
  %v171 = vpack.c.bf16 %v165, %v163
  %v172 = vpack.c.bf16 %v166, %v164
  %v173 = vpack.c.bf16 %v169, %v167
  %v174 = vpack.c.bf16 %v170, %v168
  %v175 = vld [vmem:[%s2] sm:$0xf]
  %v176 = vld [vmem:[%s2 + $0x4] sm:$0xf]
  %v177 = vld [vmem:[%s2 + $0x8] sm:$0xf]
  %v178 = vld [vmem:[%s2 + $0xc] sm:$0xf]
  %v179 = vld [vmem:[%s2 + $0x10] sm:$0xf]
  %v180 = vld [vmem:[%s2 + $0x14] sm:$0xf]
  %v181 = vld [vmem:[%s2 + $0x18] sm:$0xf]
  %v182 = vld [vmem:[%s2 + $0x1c] sm:$0xf]
  %v183 = vld [vmem:[%s2 + $0x20] sm:$0xf]
  %v184 = vld [vmem:[%s2 + $0x24] sm:$0xf]
  %v185 = vld [vmem:[%s2 + $0x28] sm:$0xf]
  %v186 = vld [vmem:[%s2 + $0x2c] sm:$0xf]
  %v187 = vld [vmem:[%s2 + $0x30] sm:$0xf]
  %v188 = vld [vmem:[%s2 + $0x34] sm:$0xf]
  %v189 = vld [vmem:[%s2 + $0x38] sm:$0xf]
  %v190 = vld [vmem:[%s2 + $0x3c] sm:$0xf]
  %v191 = vld [vmem:[%s2 + $0x40] sm:$0xf]
  %v192 = vld [vmem:[%s2 + $0x44] sm:$0xf]
  %v193 = vld [vmem:[%s2 + $0x48] sm:$0xf]
  %v194 = vld [vmem:[%s2 + $0x4c] sm:$0xf]
  %v195 = vld [vmem:[%s2 + $0x50] sm:$0xf]
  %v196 = vld [vmem:[%s2 + $0x54] sm:$0xf]
  %v197 = vld [vmem:[%s2 + $0x58] sm:$0xf]
  %v198 = vld [vmem:[%s2 + $0x5c] sm:$0xf]
  %v199 = vld [vmem:[%s2 + $0x60] sm:$0xf]
  %v200 = vld [vmem:[%s2 + $0x64] sm:$0xf]
  %v201 = vld [vmem:[%s2 + $0x68] sm:$0xf]
  %v202 = vld [vmem:[%s2 + $0x6c] sm:$0xf]
  %v203 = vld [vmem:[%s2 + $0x70] sm:$0xf]
  %v204 = vld [vmem:[%s2 + $0x74] sm:$0xf]
  %v205 = vld [vmem:[%s2 + $0x78] sm:$0xf]
  %v206 = vld [vmem:[%s2 + $0x7c] sm:$0xf]
  %v239 = vunpack.c.l.b16 %v175
  %v240 = vunpack.c.l.b16 %v176
  %v241 = vunpack.c.l.b16 %v177
  %v242 = vunpack.c.l.b16 %v178
  %v243 = vunpack.c.l.b16 %v179
  %v244 = vunpack.c.l.b16 %v180
  %v245 = vunpack.c.l.b16 %v181
  %v246 = vunpack.c.l.b16 %v182
  %v247 = vunpack.c.l.b16 %v183
  %v248 = vunpack.c.l.b16 %v184
  %v249 = vunpack.c.l.b16 %v185
  %v250 = vunpack.c.l.b16 %v186
  %v251 = vunpack.c.l.b16 %v187
  %v252 = vunpack.c.l.b16 %v188
  %v253 = vunpack.c.l.b16 %v189
  %v254 = vunpack.c.l.b16 %v190
  %v255 = vunpack.c.l.b16 %v191
  %v256 = vunpack.c.l.b16 %v192
  %v257 = vunpack.c.l.b16 %v193
  %v258 = vunpack.c.l.b16 %v194
  %v259 = vunpack.c.l.b16 %v195
  %v260 = vunpack.c.l.b16 %v196
  %v261 = vunpack.c.l.b16 %v197
  %v262 = vunpack.c.l.b16 %v198
  %v263 = vunpack.c.l.b16 %v199
  %v264 = vunpack.c.l.b16 %v200
  %v265 = vunpack.c.l.b16 %v201
  %v266 = vunpack.c.l.b16 %v202
  %v267 = vunpack.c.l.b16 %v203
  %v268 = vunpack.c.l.b16 %v204
  %v269 = vunpack.c.l.b16 %v205
  %v270 = vunpack.c.l.b16 %v206
  %v271 = vpack.c.b16 %v240, %v239
  %v272 = vpack.c.b16 %v242, %v241
  %v273 = vpack.c.b16 %v244, %v243
  %v274 = vpack.c.b16 %v246, %v245
  %v275 = vpack.c.b16 %v248, %v247
  %v276 = vpack.c.b16 %v250, %v249
  %v277 = vpack.c.b16 %v252, %v251
  %v278 = vpack.c.b16 %v254, %v253
  %v279 = vpack.c.b16 %v256, %v255
  %v280 = vpack.c.b16 %v258, %v257
  %v281 = vpack.c.b16 %v260, %v259
  %v282 = vpack.c.b16 %v262, %v261
  %v283 = vpack.c.b16 %v264, %v263
  %v284 = vpack.c.b16 %v266, %v265
  %v285 = vpack.c.b16 %v268, %v267
  %v286 = vpack.c.b16 %v270, %v269
  %303 = vmatprep.subr.bf16.mxu0 0
  %304 = vmatpush1.bf16.msra.mxu0 %v278
  %305 = vmatprep.subr.bf16.mxu0 0
  %306 = vmatpush1.bf16.msra.mxu0 %v277
  %307 = vmatprep.subr.bf16.mxu0 0
  %308 = vmatpush1.bf16.msra.mxu0 %v276
  %309 = vmatprep.subr.bf16.mxu0 0
  %310 = vmatpush1.bf16.msra.mxu0 %v275
  %311 = vmatprep.subr.bf16.mxu0 0
  %312 = vmatpush1.bf16.msra.mxu0 %v274
  %313 = vmatprep.subr.bf16.mxu0 0
  %314 = vmatpush1.bf16.msra.mxu0 %v273
  %315 = vmatprep.subr.bf16.mxu0 0
  %316 = vmatpush1.bf16.msra.mxu0 %v272
  %317 = vmatprep.subr.bf16.mxu0 0
  %318 = vmatpush1.bf16.msra.mxu0 %v271
  %319 = vmatprep.subr.bf16.mxu0 0
  %320 = vmatpush2.bf16.msra.mxu0 %v286
  %321 = vmatprep.subr.bf16.mxu0 0
  %322 = vmatpush2.bf16.msra.mxu0 %v285
  %323 = vmatprep.subr.bf16.mxu0 0
  %324 = vmatpush2.bf16.msra.mxu0 %v284
  %325 = vmatprep.subr.bf16.mxu0 0
  %326 = vmatpush2.bf16.msra.mxu0 %v283
  %327 = vmatprep.subr.bf16.mxu0 0
  %328 = vmatpush2.bf16.msra.mxu0 %v282
  %329 = vmatprep.subr.bf16.mxu0 0
  %330 = vmatpush2.bf16.msra.mxu0 %v281
  %331 = vmatprep.subr.bf16.mxu0 0
  %332 = vmatpush2.bf16.msra.mxu0 %v280
  %333 = vmatprep.subr.bf16.mxu0 0
  %334 = vmatpush2.bf16.msra.mxu0 %v279
  %335 = vmatprep.mubr.bf16.mxu0 %v172
  %336 = vmatmul.mubr.bf16.gmra.mxu0 %v171
  %v337 = vpop.f32.mrf.mxu0
  %v338 = vadd.f32 0.0, %v337
  %v339 = vpop.f32.mrf.mxu0
  %v340 = vpop.f32.mrf.mxu0
  %v341 = vpop.f32.mrf.mxu0
  %342 = vdwg.mxu0
  %v345 = vrot.slane %v171, 4
  %v346 = vrot.slane %v172, 4
  %349 = vmatprep.subr.bf16.mxu0 0
  %350 = vmatpush1.bf16.msra.mxu0 %v278
  %351 = vmatprep.subr.bf16.mxu0 0
  %352 = vmatpush1.bf16.msra.mxu0 %v277
  %353 = vmatprep.subr.bf16.mxu0 0
  %354 = vmatpush1.bf16.msra.mxu0 %v276
  %355 = vmatprep.subr.bf16.mxu0 0
  %356 = vmatpush1.bf16.msra.mxu0 %v275
  %357 = vmatprep.subr.bf16.mxu0 0
  %358 = vmatpush1.bf16.msra.mxu0 %v274
  %359 = vmatprep.subr.bf16.mxu0 0
  %360 = vmatpush1.bf16.msra.mxu0 %v273
  %361 = vmatprep.subr.bf16.mxu0 0
  %362 = vmatpush1.bf16.msra.mxu0 %v272
  %363 = vmatprep.subr.bf16.mxu0 0
  %364 = vmatpush1.bf16.msra.mxu0 %v271
  %365 = vmatprep.subr.bf16.mxu0 0
  %366 = vmatpush2.bf16.msra.mxu0 %v286
  %367 = vmatprep.subr.bf16.mxu0 0
  %368 = vmatpush2.bf16.msra.mxu0 %v285
  %369 = vmatprep.subr.bf16.mxu0 0
  %370 = vmatpush2.bf16.msra.mxu0 %v284
  %371 = vmatprep.subr.bf16.mxu0 0
  %372 = vmatpush2.bf16.msra.mxu0 %v283
  %373 = vmatprep.subr.bf16.mxu0 0
  %374 = vmatpush2.bf16.msra.mxu0 %v282
  %375 = vmatprep.subr.bf16.mxu0 0
  %376 = vmatpush2.bf16.msra.mxu0 %v281
  %377 = vmatprep.subr.bf16.mxu0 0
  %378 = vmatpush2.bf16.msra.mxu0 %v280
  %379 = vmatprep.subr.bf16.mxu0 0
  %380 = vmatpush2.bf16.msra.mxu0 %v279
  %381 = vmatprep.mubr.bf16.mxu0 %v346
  %382 = vmatmul.mubr.bf16.gmra.mxu0 %v345
  %v383 = vpop.f32.mrf.mxu0
  %v384 = vadd.f32 0.0, %v383
  %v385 = vpop.f32.mrf.mxu0
  %v386 = vpop.f32.mrf.mxu0
  %v387 = vpop.f32.mrf.mxu0
  %388 = vdwg.mxu0
  %389 = vmatprep.subr.bf16.mxu0 0
  %390 = vmatpush1.bf16.msra.mxu0 %v278
  %391 = vmatprep.subr.bf16.mxu0 0
  %392 = vmatpush1.bf16.msra.mxu0 %v277
  %393 = vmatprep.subr.bf16.mxu0 0
  %394 = vmatpush1.bf16.msra.mxu0 %v276
  %395 = vmatprep.subr.bf16.mxu0 0
  %396 = vmatpush1.bf16.msra.mxu0 %v275
  %397 = vmatprep.subr.bf16.mxu0 0
  %398 = vmatpush1.bf16.msra.mxu0 %v274
  %399 = vmatprep.subr.bf16.mxu0 0
  %400 = vmatpush1.bf16.msra.mxu0 %v273
  %401 = vmatprep.subr.bf16.mxu0 0
  %402 = vmatpush1.bf16.msra.mxu0 %v272
  %403 = vmatprep.subr.bf16.mxu0 0
  %404 = vmatpush1.bf16.msra.mxu0 %v271
  %405 = vmatprep.subr.bf16.mxu0 0
  %406 = vmatpush2.bf16.msra.mxu0 %v286
  %407 = vmatprep.subr.bf16.mxu0 0
  %408 = vmatpush2.bf16.msra.mxu0 %v285
  %409 = vmatprep.subr.bf16.mxu0 0
  %410 = vmatpush2.bf16.msra.mxu0 %v284
  %411 = vmatprep.subr.bf16.mxu0 0
  %412 = vmatpush2.bf16.msra.mxu0 %v283
  %413 = vmatprep.subr.bf16.mxu0 0
  %414 = vmatpush2.bf16.msra.mxu0 %v282
  %415 = vmatprep.subr.bf16.mxu0 0
  %416 = vmatpush2.bf16.msra.mxu0 %v281
  %417 = vmatprep.subr.bf16.mxu0 0
  %418 = vmatpush2.bf16.msra.mxu0 %v280
  %419 = vmatprep.subr.bf16.mxu0 0
  %420 = vmatpush2.bf16.msra.mxu0 %v279
  %421 = vmatprep.mubr.bf16.mxu0 %v174
  %422 = vmatmul.mubr.bf16.gmra.mxu0 %v173
  %v423 = vpop.f32.mrf.mxu0
  %v424 = vadd.f32 0.0, %v423
  %v425 = vpop.f32.mrf.mxu0
  %v426 = vpop.f32.mrf.mxu0
  %v427 = vpop.f32.mrf.mxu0
  %428 = vdwg.mxu0
  %v431 = vrot.slane %v173, 4
  %v432 = vrot.slane %v174, 4
  %435 = vmatprep.subr.bf16.mxu0 0
  %436 = vmatpush1.bf16.msra.mxu0 %v278
  %437 = vmatprep.subr.bf16.mxu0 0
  %438 = vmatpush1.bf16.msra.mxu0 %v277
  %439 = vmatprep.subr.bf16.mxu0 0
  %440 = vmatpush1.bf16.msra.mxu0 %v276
  %441 = vmatprep.subr.bf16.mxu0 0
  %442 = vmatpush1.bf16.msra.mxu0 %v275
  %443 = vmatprep.subr.bf16.mxu0 0
  %444 = vmatpush1.bf16.msra.mxu0 %v274
  %445 = vmatprep.subr.bf16.mxu0 0
  %446 = vmatpush1.bf16.msra.mxu0 %v273
  %447 = vmatprep.subr.bf16.mxu0 0
  %448 = vmatpush1.bf16.msra.mxu0 %v272
  %449 = vmatprep.subr.bf16.mxu0 0
  %450 = vmatpush1.bf16.msra.mxu0 %v271
  %451 = vmatprep.subr.bf16.mxu0 0
  %452 = vmatpush2.bf16.msra.mxu0 %v286
  %453 = vmatprep.subr.bf16.mxu0 0
  %454 = vmatpush2.bf16.msra.mxu0 %v285
  %455 = vmatprep.subr.bf16.mxu0 0
  %456 = vmatpush2.bf16.msra.mxu0 %v284
  %457 = vmatprep.subr.bf16.mxu0 0
  %458 = vmatpush2.bf16.msra.mxu0 %v283
  %459 = vmatprep.subr.bf16.mxu0 0
  %460 = vmatpush2.bf16.msra.mxu0 %v282
  %461 = vmatprep.subr.bf16.mxu0 0
  %462 = vmatpush2.bf16.msra.mxu0 %v281
  %463 = vmatprep.subr.bf16.mxu0 0
  %464 = vmatpush2.bf16.msra.mxu0 %v280
  %465 = vmatprep.subr.bf16.mxu0 0
  %466 = vmatpush2.bf16.msra.mxu0 %v279
  %467 = vmatprep.mubr.bf16.mxu0 %v432
  %468 = vmatmul.mubr.bf16.gmra.mxu0 %v431
  %v469 = vpop.f32.mrf.mxu0
  %v470 = vadd.f32 0.0, %v469
  %v471 = vpop.f32.mrf.mxu0
  %v472 = vpop.f32.mrf.mxu0
  %v473 = vpop.f32.mrf.mxu0
  %474 = vdwg.mxu0
  %v475 = vrot.slane %v338, 4
  %v476 = vadd.f32 %v338, %v475
  %v477 = vrot.slane %v476, 2
  %v478 = vadd.f32 %v476, %v477
  %v479 = vrot.slane %v478, 1
  %v480 = vadd.f32 %v478, %v479
  %v481 = vrot.slane %v384, 4
  %v482 = vadd.f32 %v384, %v481
  %v483 = vrot.slane %v482, 2
  %v484 = vadd.f32 %v482, %v483
  %v485 = vrot.slane %v484, 1
  %v486 = vadd.f32 %v484, %v485
  %v487 = vrot.slane %v424, 4
  %v488 = vadd.f32 %v424, %v487
  %v489 = vrot.slane %v488, 2
  %v490 = vadd.f32 %v488, %v489
  %v491 = vrot.slane %v490, 1
  %v492 = vadd.f32 %v490, %v491
  %v493 = vrot.slane %v470, 4
  %v494 = vadd.f32 %v470, %v493
  %v495 = vrot.slane %v494, 2
  %v496 = vadd.f32 %v494, %v495
  %v497 = vrot.slane %v496, 1
  %v498 = vadd.f32 %v496, %v497
  %v499 = vmul.f32 %v338, %v338
  %v500 = vmul.f32 %v384, %v384
  %v501 = vmul.f32 %v424, %v424
  %v502 = vmul.f32 %v470, %v470
  %v503 = vrot.slane %v499, 4
  %v504 = vadd.f32 %v499, %v503
  %v505 = vrot.slane %v504, 2
  %v506 = vadd.f32 %v504, %v505
  %v507 = vrot.slane %v506, 1
  %v508 = vadd.f32 %v506, %v507
  %v509 = vrot.slane %v500, 4
  %v510 = vadd.f32 %v500, %v509
  %v511 = vrot.slane %v510, 2
  %v512 = vadd.f32 %v510, %v511
  %v513 = vrot.slane %v512, 1
  %v514 = vadd.f32 %v512, %v513
  %v515 = vrot.slane %v501, 4
  %v516 = vadd.f32 %v501, %v515
  %v517 = vrot.slane %v516, 2
  %v518 = vadd.f32 %v516, %v517
  %v519 = vrot.slane %v518, 1
  %v520 = vadd.f32 %v518, %v519
  %v521 = vrot.slane %v502, 4
  %v522 = vadd.f32 %v502, %v521
  %v523 = vrot.slane %v522, 2
  %v524 = vadd.f32 %v522, %v523
  %v525 = vrot.slane %v524, 1
  %v526 = vadd.f32 %v524, %v525
  %v527 = vadd.f32 %v480, %v486
  %v528 = vadd.f32 %v527, %v492
  %v529 = vadd.f32 %v528, %v498
  %v530 = vadd.f32 %v508, %v514
  %v531 = vadd.f32 %v530, %v520
  %v532 = vadd.f32 %v531, %v526
  %v533 = vmul.f32 %v529, 0.03125
  %v534 = vmul.f32 %v532, 0.03125
  %v535 = vmul.f32 %v533, %v533
  %v536 = vsub.f32 %v534, %v535
  %v537 = vld [vmem:[%s3] sm:$0x1]
  %v538 = vadd.f32 %v536, 1e-05
  %v539 = vrsqrt.pop %v538
  %v540 = vmul.f32 %v537, %v539
  %v541 = vld [vmem:[%s4] sm:$0x1]
  %v542 = vmul.f32 %v533, %v540
  %v543 = vsub.f32 %v541, %v542
  %v544 = vlaneseq
  %v545 = vshrl.u32 %v544, 7
  %v546 = vsub.s32 0, %v545
  %v547 = vrot.slane %v540, %v546
  %v548 = vmul.f32 %v338, %v547
  %v549 = vmul.f32 %v384, %v547
  %v550 = vmul.f32 %v424, %v547
  %v551 = vmul.f32 %v470, %v547
  %v552 = vlaneseq
  %v553 = vshrl.u32 %v552, 7
  %v554 = vsub.s32 0, %v553
  %v555 = vrot.slane %v543, %v554
  %v556 = vadd.f32 %v548, %v555
  %v557 = vadd.f32 %v549, %v555
  %v558 = vadd.f32 %v550, %v555
  %v559 = vadd.f32 %v551, %v555
  %v560 = vmul.f32 %v556, 0.2
  %v561 = vmul.f32 %v557, 0.2
  %v562 = vmul.f32 %v558, 0.2
  %v563 = vmul.f32 %v559, 0.2
  %v564 = vmax.f32 %v556, %v560
  %v565 = vmax.f32 %v557, %v561
  %v566 = vmax.f32 %v558, %v562
  %v567 = vmax.f32 %v559, %v563
  %v568 = vpack.c.bf16 %v564, %v564
  %v569 = vpack.c.bf16 %v565, %v565
  %v570 = vpack.c.bf16 %v566, %v566
  %v571 = vpack.c.bf16 %v567, %v567
  %v572 = vld [vmem:[%s5] sm:$0xff]
  %v573 = vld [vmem:[%s5 + $0x8] sm:$0xff]
  %v574 = vld [vmem:[%s5 + $0x10] sm:$0xff]
  %v575 = vld [vmem:[%s5 + $0x18] sm:$0xff]
  %v576 = vld [vmem:[%s5 + $0x20] sm:$0xff]
  %v577 = vld [vmem:[%s5 + $0x28] sm:$0xff]
  %v578 = vld [vmem:[%s5 + $0x30] sm:$0xff]
  %v579 = vld [vmem:[%s5 + $0x38] sm:$0xff]
  %v580 = vld [vmem:[%s5 + $0x40] sm:$0xff]
  %v581 = vld [vmem:[%s5 + $0x48] sm:$0xff]
  %v582 = vld [vmem:[%s5 + $0x50] sm:$0xff]
  %v583 = vld [vmem:[%s5 + $0x58] sm:$0xff]
  %v584 = vld [vmem:[%s5 + $0x60] sm:$0xff]
  %v585 = vld [vmem:[%s5 + $0x68] sm:$0xff]
  %v586 = vld [vmem:[%s5 + $0x70] sm:$0xff]
  %v587 = vld [vmem:[%s5 + $0x78] sm:$0xff]
  %v588 = vld [vmem:[%s5 + $0x80] sm:$0xff]
  %v589 = vld [vmem:[%s5 + $0x88] sm:$0xff]
  %v590 = vld [vmem:[%s5 + $0x90] sm:$0xff]
  %v591 = vld [vmem:[%s5 + $0x98] sm:$0xff]
  %v592 = vld [vmem:[%s5 + $0xa0] sm:$0xff]
  %v593 = vld [vmem:[%s5 + $0xa8] sm:$0xff]
  %v594 = vld [vmem:[%s5 + $0xb0] sm:$0xff]
  %v595 = vld [vmem:[%s5 + $0xb8] sm:$0xff]
  %v596 = vld [vmem:[%s5 + $0xc0] sm:$0xff]
  %v597 = vld [vmem:[%s5 + $0xc8] sm:$0xff]
  %v598 = vld [vmem:[%s5 + $0xd0] sm:$0xff]
  %v599 = vld [vmem:[%s5 + $0xd8] sm:$0xff]
  %v600 = vld [vmem:[%s5 + $0xe0] sm:$0xff]
  %v601 = vld [vmem:[%s5 + $0xe8] sm:$0xff]
  %v602 = vld [vmem:[%s5 + $0xf0] sm:$0xff]
  %v603 = vld [vmem:[%s5 + $0xf8] sm:$0xff]
  %v604 = vld [vmem:[%s5 + $0x100] sm:$0xff]
  %v605 = vld [vmem:[%s5 + $0x108] sm:$0xff]
  %v606 = vld [vmem:[%s5 + $0x110] sm:$0xff]
  %v607 = vld [vmem:[%s5 + $0x118] sm:$0xff]
  %v608 = vld [vmem:[%s5 + $0x120] sm:$0xff]
  %v609 = vld [vmem:[%s5 + $0x128] sm:$0xff]
  %v610 = vld [vmem:[%s5 + $0x130] sm:$0xff]
  %v611 = vld [vmem:[%s5 + $0x138] sm:$0xff]
  %v612 = vld [vmem:[%s5 + $0x140] sm:$0xff]
  %v613 = vld [vmem:[%s5 + $0x148] sm:$0xff]
  %v614 = vld [vmem:[%s5 + $0x150] sm:$0xff]
  %v615 = vld [vmem:[%s5 + $0x158] sm:$0xff]
  %v616 = vld [vmem:[%s5 + $0x160] sm:$0xff]
  %v617 = vld [vmem:[%s5 + $0x168] sm:$0xff]
  %v618 = vld [vmem:[%s5 + $0x170] sm:$0xff]
  %v619 = vld [vmem:[%s5 + $0x178] sm:$0xff]
  %v620 = vld [vmem:[%s5 + $0x180] sm:$0xff]
  %v621 = vld [vmem:[%s5 + $0x188] sm:$0xff]
  %v622 = vld [vmem:[%s5 + $0x190] sm:$0xff]
  %v623 = vld [vmem:[%s5 + $0x198] sm:$0xff]
  %v624 = vld [vmem:[%s5 + $0x1a0] sm:$0xff]
  %v625 = vld [vmem:[%s5 + $0x1a8] sm:$0xff]
  %v626 = vld [vmem:[%s5 + $0x1b0] sm:$0xff]
  %v627 = vld [vmem:[%s5 + $0x1b8] sm:$0xff]
  %v628 = vld [vmem:[%s5 + $0x1c0] sm:$0xff]
  %v629 = vld [vmem:[%s5 + $0x1c8] sm:$0xff]
  %v630 = vld [vmem:[%s5 + $0x1d0] sm:$0xff]
  %v631 = vld [vmem:[%s5 + $0x1d8] sm:$0xff]
  %v632 = vld [vmem:[%s5 + $0x1e0] sm:$0xff]
  %v633 = vld [vmem:[%s5 + $0x1e8] sm:$0xff]
  %v634 = vld [vmem:[%s5 + $0x1f0] sm:$0xff]
  %v635 = vld [vmem:[%s5 + $0x1f8] sm:$0xff]
  %v700 = vunpack.c.l.b16 %v572
  %v701 = vunpack.c.h.b16 %v572
  %v702 = vunpack.c.l.b16 %v573
  %v703 = vunpack.c.h.b16 %v573
  %v704 = vunpack.c.l.b16 %v574
  %v705 = vunpack.c.h.b16 %v574
  %v706 = vunpack.c.l.b16 %v575
  %v707 = vunpack.c.h.b16 %v575
  %v708 = vunpack.c.l.b16 %v576
  %v709 = vunpack.c.h.b16 %v576
  %v710 = vunpack.c.l.b16 %v577
  %v711 = vunpack.c.h.b16 %v577
  %v712 = vunpack.c.l.b16 %v578
  %v713 = vunpack.c.h.b16 %v578
  %v714 = vunpack.c.l.b16 %v579
  %v715 = vunpack.c.h.b16 %v579
  %v716 = vunpack.c.l.b16 %v580
  %v717 = vunpack.c.h.b16 %v580
  %v718 = vunpack.c.l.b16 %v581
  %v719 = vunpack.c.h.b16 %v581
  %v720 = vunpack.c.l.b16 %v582
  %v721 = vunpack.c.h.b16 %v582
  %v722 = vunpack.c.l.b16 %v583
  %v723 = vunpack.c.h.b16 %v583
  %v724 = vunpack.c.l.b16 %v584
  %v725 = vunpack.c.h.b16 %v584
  %v726 = vunpack.c.l.b16 %v585
  %v727 = vunpack.c.h.b16 %v585
  %v728 = vunpack.c.l.b16 %v586
  %v729 = vunpack.c.h.b16 %v586
  %v730 = vunpack.c.l.b16 %v587
  %v731 = vunpack.c.h.b16 %v587
  %v732 = vunpack.c.l.b16 %v588
  %v733 = vunpack.c.h.b16 %v588
  %v734 = vunpack.c.l.b16 %v589
  %v735 = vunpack.c.h.b16 %v589
  %v736 = vunpack.c.l.b16 %v590
  %v737 = vunpack.c.h.b16 %v590
  %v738 = vunpack.c.l.b16 %v591
  %v739 = vunpack.c.h.b16 %v591
  %v740 = vunpack.c.l.b16 %v592
  %v741 = vunpack.c.h.b16 %v592
  %v742 = vunpack.c.l.b16 %v593
  %v743 = vunpack.c.h.b16 %v593
  %v744 = vunpack.c.l.b16 %v594
  %v745 = vunpack.c.h.b16 %v594
  %v746 = vunpack.c.l.b16 %v595
  %v747 = vunpack.c.h.b16 %v595
  %v748 = vunpack.c.l.b16 %v596
  %v749 = vunpack.c.h.b16 %v596
  %v750 = vunpack.c.l.b16 %v597
  %v751 = vunpack.c.h.b16 %v597
  %v752 = vunpack.c.l.b16 %v598
  %v753 = vunpack.c.h.b16 %v598
  %v754 = vunpack.c.l.b16 %v599
  %v755 = vunpack.c.h.b16 %v599
  %v756 = vunpack.c.l.b16 %v600
  %v757 = vunpack.c.h.b16 %v600
  %v758 = vunpack.c.l.b16 %v601
  %v759 = vunpack.c.h.b16 %v601
  %v760 = vunpack.c.l.b16 %v602
  %v761 = vunpack.c.h.b16 %v602
  %v762 = vunpack.c.l.b16 %v603
  %v763 = vunpack.c.h.b16 %v603
  %v764 = vunpack.c.l.b16 %v604
  %v765 = vunpack.c.h.b16 %v604
  %v766 = vunpack.c.l.b16 %v605
  %v767 = vunpack.c.h.b16 %v605
  %v768 = vunpack.c.l.b16 %v606
  %v769 = vunpack.c.h.b16 %v606
  %v770 = vunpack.c.l.b16 %v607
  %v771 = vunpack.c.h.b16 %v607
  %v772 = vunpack.c.l.b16 %v608
  %v773 = vunpack.c.h.b16 %v608
  %v774 = vunpack.c.l.b16 %v609
  %v775 = vunpack.c.h.b16 %v609
  %v776 = vunpack.c.l.b16 %v610
  %v777 = vunpack.c.h.b16 %v610
  %v778 = vunpack.c.l.b16 %v611
  %v779 = vunpack.c.h.b16 %v611
  %v780 = vunpack.c.l.b16 %v612
  %v781 = vunpack.c.h.b16 %v612
  %v782 = vunpack.c.l.b16 %v613
  %v783 = vunpack.c.h.b16 %v613
  %v784 = vunpack.c.l.b16 %v614
  %v785 = vunpack.c.h.b16 %v614
  %v786 = vunpack.c.l.b16 %v615
  %v787 = vunpack.c.h.b16 %v615
  %v788 = vunpack.c.l.b16 %v616
  %v789 = vunpack.c.h.b16 %v616
  %v790 = vunpack.c.l.b16 %v617
  %v791 = vunpack.c.h.b16 %v617
  %v792 = vunpack.c.l.b16 %v618
  %v793 = vunpack.c.h.b16 %v618
  %v794 = vunpack.c.l.b16 %v619
  %v795 = vunpack.c.h.b16 %v619
  %v796 = vunpack.c.l.b16 %v620
  %v797 = vunpack.c.h.b16 %v620
  %v798 = vunpack.c.l.b16 %v621
  %v799 = vunpack.c.h.b16 %v621
  %v800 = vunpack.c.l.b16 %v622
  %v801 = vunpack.c.h.b16 %v622
  %v802 = vunpack.c.l.b16 %v623
  %v803 = vunpack.c.h.b16 %v623
  %v804 = vunpack.c.l.b16 %v624
  %v805 = vunpack.c.h.b16 %v624
  %v806 = vunpack.c.l.b16 %v625
  %v807 = vunpack.c.h.b16 %v625
  %v808 = vunpack.c.l.b16 %v626
  %v809 = vunpack.c.h.b16 %v626
  %v810 = vunpack.c.l.b16 %v627
  %v811 = vunpack.c.h.b16 %v627
  %v812 = vunpack.c.l.b16 %v628
  %v813 = vunpack.c.h.b16 %v628
  %v814 = vunpack.c.l.b16 %v629
  %v815 = vunpack.c.h.b16 %v629
  %v816 = vunpack.c.l.b16 %v630
  %v817 = vunpack.c.h.b16 %v630
  %v818 = vunpack.c.l.b16 %v631
  %v819 = vunpack.c.h.b16 %v631
  %v820 = vunpack.c.l.b16 %v632
  %v821 = vunpack.c.h.b16 %v632
  %v822 = vunpack.c.l.b16 %v633
  %v823 = vunpack.c.h.b16 %v633
  %v824 = vunpack.c.l.b16 %v634
  %v825 = vunpack.c.h.b16 %v634
  %v826 = vunpack.c.l.b16 %v635
  %v827 = vunpack.c.h.b16 %v635
  %v828 = vpack.c.b16 %v702, %v700
  %v829 = vpack.c.b16 %v703, %v701
  %v830 = vpack.c.b16 %v706, %v704
  %v831 = vpack.c.b16 %v707, %v705
  %v832 = vpack.c.b16 %v710, %v708
  %v833 = vpack.c.b16 %v711, %v709
  %v834 = vpack.c.b16 %v714, %v712
  %v835 = vpack.c.b16 %v715, %v713
  %v836 = vpack.c.b16 %v718, %v716
  %v837 = vpack.c.b16 %v719, %v717
  %v838 = vpack.c.b16 %v722, %v720
  %v839 = vpack.c.b16 %v723, %v721
  %v840 = vpack.c.b16 %v726, %v724
  %v841 = vpack.c.b16 %v727, %v725
  %v842 = vpack.c.b16 %v730, %v728
  %v843 = vpack.c.b16 %v731, %v729
  %v844 = vpack.c.b16 %v734, %v732
  %v845 = vpack.c.b16 %v735, %v733
  %v846 = vpack.c.b16 %v738, %v736
  %v847 = vpack.c.b16 %v739, %v737
  %v848 = vpack.c.b16 %v742, %v740
  %v849 = vpack.c.b16 %v743, %v741
  %v850 = vpack.c.b16 %v746, %v744
  %v851 = vpack.c.b16 %v747, %v745
  %v852 = vpack.c.b16 %v750, %v748
  %v853 = vpack.c.b16 %v751, %v749
  %v854 = vpack.c.b16 %v754, %v752
  %v855 = vpack.c.b16 %v755, %v753
  %v856 = vpack.c.b16 %v758, %v756
  %v857 = vpack.c.b16 %v759, %v757
  %v858 = vpack.c.b16 %v762, %v760
  %v859 = vpack.c.b16 %v763, %v761
  %v860 = vpack.c.b16 %v766, %v764
  %v861 = vpack.c.b16 %v767, %v765
  %v862 = vpack.c.b16 %v770, %v768
  %v863 = vpack.c.b16 %v771, %v769
  %v864 = vpack.c.b16 %v774, %v772
  %v865 = vpack.c.b16 %v775, %v773
  %v866 = vpack.c.b16 %v778, %v776
  %v867 = vpack.c.b16 %v779, %v777
  %v868 = vpack.c.b16 %v782, %v780
  %v869 = vpack.c.b16 %v783, %v781
  %v870 = vpack.c.b16 %v786, %v784
  %v871 = vpack.c.b16 %v787, %v785
  %v872 = vpack.c.b16 %v790, %v788
  %v873 = vpack.c.b16 %v791, %v789
  %v874 = vpack.c.b16 %v794, %v792
  %v875 = vpack.c.b16 %v795, %v793
  %v876 = vpack.c.b16 %v798, %v796
  %v877 = vpack.c.b16 %v799, %v797
  %v878 = vpack.c.b16 %v802, %v800
  %v879 = vpack.c.b16 %v803, %v801
  %v880 = vpack.c.b16 %v806, %v804
  %v881 = vpack.c.b16 %v807, %v805
  %v882 = vpack.c.b16 %v810, %v808
  %v883 = vpack.c.b16 %v811, %v809
  %v884 = vpack.c.b16 %v814, %v812
  %v885 = vpack.c.b16 %v815, %v813
  %v886 = vpack.c.b16 %v818, %v816
  %v887 = vpack.c.b16 %v819, %v817
  %v888 = vpack.c.b16 %v822, %v820
  %v889 = vpack.c.b16 %v823, %v821
  %v890 = vpack.c.b16 %v826, %v824
  %v891 = vpack.c.b16 %v827, %v825
  %956 = vmatprep.subr.bf16.mxu0 %v843
  %957 = vmatpush1.bf16.msra.mxu0 %v842
  %958 = vmatprep.subr.bf16.mxu0 %v841
  %959 = vmatpush1.bf16.msra.mxu0 %v840
  %960 = vmatprep.subr.bf16.mxu0 %v839
  %961 = vmatpush1.bf16.msra.mxu0 %v838
  %962 = vmatprep.subr.bf16.mxu0 %v837
  %963 = vmatpush1.bf16.msra.mxu0 %v836
  %964 = vmatprep.subr.bf16.mxu0 %v835
  %965 = vmatpush1.bf16.msra.mxu0 %v834
  %966 = vmatprep.subr.bf16.mxu0 %v833
  %967 = vmatpush1.bf16.msra.mxu0 %v832
  %968 = vmatprep.subr.bf16.mxu0 %v831
  %969 = vmatpush1.bf16.msra.mxu0 %v830
  %970 = vmatprep.subr.bf16.mxu0 %v829
  %971 = vmatpush1.bf16.msra.mxu0 %v828
  %972 = vmatprep.subr.bf16.mxu0 %v859
  %973 = vmatpush2.bf16.msra.mxu0 %v858
  %974 = vmatprep.subr.bf16.mxu0 %v857
  %975 = vmatpush2.bf16.msra.mxu0 %v856
  %976 = vmatprep.subr.bf16.mxu0 %v855
  %977 = vmatpush2.bf16.msra.mxu0 %v854
  %978 = vmatprep.subr.bf16.mxu0 %v853
  %979 = vmatpush2.bf16.msra.mxu0 %v852
  %980 = vmatprep.subr.bf16.mxu0 %v851
  %981 = vmatpush2.bf16.msra.mxu0 %v850
  %982 = vmatprep.subr.bf16.mxu0 %v849
  %983 = vmatpush2.bf16.msra.mxu0 %v848
  %984 = vmatprep.subr.bf16.mxu0 %v847
  %985 = vmatpush2.bf16.msra.mxu0 %v846
  %986 = vmatprep.subr.bf16.mxu0 %v845
  %987 = vmatpush2.bf16.msra.mxu0 %v844
  %988 = vmatprep.mubr.bf16.mxu0 %v569
  %989 = vmatmul.mubr.bf16.gmra.mxu0 %v568
  %v990 = vpop.f32.mrf.mxu0
  %v991 = vadd.f32 0.0, %v990
  %v992 = vpop.f32.mrf.mxu0
  %v993 = vadd.f32 0.0, %v992
  %v994 = vpop.f32.mrf.mxu0
  %v995 = vpop.f32.mrf.mxu0
  %996 = vdwg.mxu0
  %997 = vmatprep.subr.bf16.mxu0 %v875
  %998 = vmatpush1.bf16.msra.mxu0 %v874
  %999 = vmatprep.subr.bf16.mxu0 %v873
  %1000 = vmatpush1.bf16.msra.mxu0 %v872
  %1001 = vmatprep.subr.bf16.mxu0 %v871
  %1002 = vmatpush1.bf16.msra.mxu0 %v870
  %1003 = vmatprep.subr.bf16.mxu0 %v869
  %1004 = vmatpush1.bf16.msra.mxu0 %v868
  %1005 = vmatprep.subr.bf16.mxu0 %v867
  %1006 = vmatpush1.bf16.msra.mxu0 %v866
  %1007 = vmatprep.subr.bf16.mxu0 %v865
  %1008 = vmatpush1.bf16.msra.mxu0 %v864
  %1009 = vmatprep.subr.bf16.mxu0 %v863
  %1010 = vmatpush1.bf16.msra.mxu0 %v862
  %1011 = vmatprep.subr.bf16.mxu0 %v861
  %1012 = vmatpush1.bf16.msra.mxu0 %v860
  %1013 = vmatprep.subr.bf16.mxu0 %v891
  %1014 = vmatpush2.bf16.msra.mxu0 %v890
  %1015 = vmatprep.subr.bf16.mxu0 %v889
  %1016 = vmatpush2.bf16.msra.mxu0 %v888
  %1017 = vmatprep.subr.bf16.mxu0 %v887
  %1018 = vmatpush2.bf16.msra.mxu0 %v886
  %1019 = vmatprep.subr.bf16.mxu0 %v885
  %1020 = vmatpush2.bf16.msra.mxu0 %v884
  %1021 = vmatprep.subr.bf16.mxu0 %v883
  %1022 = vmatpush2.bf16.msra.mxu0 %v882
  %1023 = vmatprep.subr.bf16.mxu0 %v881
  %1024 = vmatpush2.bf16.msra.mxu0 %v880
  %1025 = vmatprep.subr.bf16.mxu0 %v879
  %1026 = vmatpush2.bf16.msra.mxu0 %v878
  %1027 = vmatprep.subr.bf16.mxu0 %v877
  %1028 = vmatpush2.bf16.msra.mxu0 %v876
  %1029 = vmatprep.mubr.bf16.mxu0 %v571
  %1030 = vmatmul.mubr.bf16.gmra.mxu0 %v570
  %v1031 = vpop.f32.mrf.mxu0
  %v1032 = vadd.f32 %v991, %v1031
  %v1033 = vpop.f32.mrf.mxu0
  %v1034 = vadd.f32 %v993, %v1033
  %v1035 = vpop.f32.mrf.mxu0
  %v1036 = vpop.f32.mrf.mxu0
  %1037 = vdwg.mxu0
  %v1038 = vrot.slane %v1032, 4
  %v1039 = vadd.f32 %v1032, %v1038
  %v1040 = vrot.slane %v1039, 2
  %v1041 = vadd.f32 %v1039, %v1040
  %v1042 = vrot.slane %v1041, 1
  %v1043 = vadd.f32 %v1041, %v1042
  %v1044 = vrot.slane %v1034, 4
  %v1045 = vadd.f32 %v1034, %v1044
  %v1046 = vrot.slane %v1045, 2
  %v1047 = vadd.f32 %v1045, %v1046
  %v1048 = vrot.slane %v1047, 1
  %v1049 = vadd.f32 %v1047, %v1048
  %v1050 = vmul.f32 %v1043, 0.125
  %v1051 = vmul.f32 %v1049, 0.125
  %v1052 = vmul.f32 %v1032, %v1032
  %v1053 = vmul.f32 %v1034, %v1034
  %v1054 = vrot.slane %v1052, 4
  %v1055 = vadd.f32 %v1052, %v1054
  %v1056 = vrot.slane %v1055, 2
  %v1057 = vadd.f32 %v1055, %v1056
  %v1058 = vrot.slane %v1057, 1
  %v1059 = vadd.f32 %v1057, %v1058
  %v1060 = vrot.slane %v1053, 4
  %v1061 = vadd.f32 %v1053, %v1060
  %v1062 = vrot.slane %v1061, 2
  %v1063 = vadd.f32 %v1061, %v1062
  %v1064 = vrot.slane %v1063, 1
  %v1065 = vadd.f32 %v1063, %v1064
  %v1066 = vmul.f32 %v1059, 0.125
  %v1067 = vmul.f32 %v1065, 0.125
  %v1068 = vmul.f32 %v1050, %v1050
  %v1069 = vmul.f32 %v1051, %v1051
  %v1070 = vsub.f32 %v1066, %v1068
  %v1071 = vsub.f32 %v1067, %v1069
  %v1072 = vld [vmem:[%s6] sm:$0x3]
  %v1073 = vadd.f32 %v1070, 1e-05
  %v1074 = vadd.f32 %v1071, 1e-05
  %v1075 = vrsqrt.pop %v1073
  %v1076 = vrsqrt.pop %v1074
  %v1079 = vcombine.low %v1075, %v1076
  %v1081 = vunpack.c.l.s4 1966171168
  %v1082 = vunpack.c.0.s8 %v1081
  %v1083 = vlaneseq
  %v1084 = vshrl.u32 %v1083, 7
  %v1085 = vsub.s32 %v1082, %v1084
  %v1086 = vrot.slane %v1079, %v1085
  %v1088 = vunpack.c.l.s4 1966171168
  %v1089 = vunpack.c.0.s8 %v1088
  %v1090 = vlaneseq
  %v1091 = vshrl.u32 %v1090, 7
  %v1092 = vsub.s32 %v1089, %v1091
  %v1093 = vrot.slane %v1086, %v1092
  %v1095 = vmul.f32 %v1072, %v1093
  %v1096 = vld [vmem:[%s7] sm:$0x3]
  %v1098 = vlaneseq
  %v1099 = vshrl.u32 %v1098, 7
  %v1100 = vsub.s32 0, %v1099
  %v1101 = vrot.slane %v1095, %v1100
  %v1102 = vlaneseq
  %v1103 = vshrl.u32 %v1102, 7
  %v1104 = vsub.s32 1, %v1103
  %v1105 = vrot.slane %v1095, %v1104
  %v1108 = vmul.f32 %v1050, %v1101
  %v1109 = vmul.f32 %v1051, %v1105
  %v1112 = vcombine.low %v1108, %v1109
  %v1114 = vunpack.c.l.s4 1966171168
  %v1115 = vunpack.c.0.s8 %v1114
  %v1116 = vlaneseq
  %v1117 = vshrl.u32 %v1116, 7
  %v1118 = vsub.s32 %v1115, %v1117
  %v1119 = vrot.slane %v1112, %v1118
  %v1121 = vunpack.c.l.s4 1966171168
  %v1122 = vunpack.c.0.s8 %v1121
  %v1123 = vlaneseq
  %v1124 = vshrl.u32 %v1123, 7
  %v1125 = vsub.s32 %v1122, %v1124
  %v1126 = vrot.slane %v1119, %v1125
  %v1128 = vsub.f32 %v1096, %v1126
  %v1129 = vmul.f32 %v1032, %v1101
  %v1130 = vmul.f32 %v1034, %v1105
  %v1132 = vlaneseq
  %v1133 = vshrl.u32 %v1132, 7
  %v1134 = vsub.s32 0, %v1133
  %v1135 = vrot.slane %v1128, %v1134
  %v1136 = vlaneseq
  %v1137 = vshrl.u32 %v1136, 7
  %v1138 = vsub.s32 1, %v1137
  %v1139 = vrot.slane %v1128, %v1138
  %v1142 = vadd.f32 %v1129, %v1135
  %v1143 = vadd.f32 %v1130, %v1139
  %v1144 = vmul.f32 %v1142, 0.2
  %v1145 = vmul.f32 %v1143, 0.2
  %v1146 = vmax.f32 %v1142, %v1144
  %v1147 = vmax.f32 %v1143, %v1145
  %v1148 = vld [vmem:[%s8] sm:$0xff]
  %v1150 = vlaneseq
  %v1151 = vshrl.u32 %v1150, 7
  %v1152 = vsub.s32 0, %v1151
  %v1153 = vrot.slane %v1148, %v1152
  %v1154 = vlaneseq
  %v1155 = vshrl.u32 %v1154, 7
  %v1156 = vsub.s32 4, %v1155
  %v1157 = vrot.slane %v1148, %v1156
  %v1160 = vlaneseq
  %v1161 = vshrl.u32 %v1160, 7
  %v1162 = vsub.s32 0, %v1161
  %v1163 = vrot.slane %v1153, %v1162
  %v1164 = vlaneseq
  %v1165 = vshrl.u32 %v1164, 7
  %v1166 = vsub.s32 0, %v1165
  %v1167 = vrot.slane %v1157, %v1166
  %v1168 = vmul.f32 %v1146, %v1163
  %v1169 = vmul.f32 %v1147, %v1167
  %vm1170 = vcmask 1041408
  %v1171 = vsel %vm1170, %v1168, 0.0
  %v1172 = vsel %vm1170, %v1169, 0.0
  %v1173 = vadd.f32 %v1171, %v1172
  %1174 = vadd.xlane.f32.xlu0 %v1173
  %v1175 = vpop.xlane.xlu0 %1174
  %v1176 = vlaneseq
  %v1177 = vshrl.u32 %v1176, 7
  %v1178 = vsub.s32 1, %v1177
  %v1179 = vrot.slane %v1148, %v1178
  %v1180 = vlaneseq
  %v1181 = vshrl.u32 %v1180, 7
  %v1182 = vsub.s32 5, %v1181
  %v1183 = vrot.slane %v1148, %v1182
  %v1186 = vlaneseq
  %v1187 = vshrl.u32 %v1186, 7
  %v1188 = vsub.s32 1, %v1187
  %v1189 = vrot.slane %v1179, %v1188
  %v1190 = vlaneseq
  %v1191 = vshrl.u32 %v1190, 7
  %v1192 = vsub.s32 1, %v1191
  %v1193 = vrot.slane %v1183, %v1192
  %v1194 = vmul.f32 %v1146, %v1189
  %v1195 = vmul.f32 %v1147, %v1193
  %vm1196 = vcmask 1043458
  %v1197 = vsel %vm1196, %v1194, 0.0
  %v1198 = vsel %vm1196, %v1195, 0.0
  %v1199 = vadd.f32 %v1197, %v1198
  %1200 = vadd.xlane.f32.xlu0 %v1199
  %v1201 = vpop.xlane.xlu0 %1200
  %v1202 = vlaneseq
  %v1203 = vshrl.u32 %v1202, 7
  %v1204 = vsub.s32 2, %v1203
  %v1205 = vrot.slane %v1148, %v1204
  %v1206 = vlaneseq
  %v1207 = vshrl.u32 %v1206, 7
  %v1208 = vsub.s32 6, %v1207
  %v1209 = vrot.slane %v1148, %v1208
  %v1212 = vlaneseq
  %v1213 = vshrl.u32 %v1212, 7
  %v1214 = vsub.s32 2, %v1213
  %v1215 = vrot.slane %v1205, %v1214
  %v1216 = vlaneseq
  %v1217 = vshrl.u32 %v1216, 7
  %v1218 = vsub.s32 2, %v1217
  %v1219 = vrot.slane %v1209, %v1218
  %v1220 = vmul.f32 %v1146, %v1215
  %v1221 = vmul.f32 %v1147, %v1219
  %vm1222 = vcmask 1045508
  %v1223 = vsel %vm1222, %v1220, 0.0
  %v1224 = vsel %vm1222, %v1221, 0.0
  %v1225 = vadd.f32 %v1223, %v1224
  %1226 = vadd.xlane.f32.xlu0 %v1225
  %v1227 = vpop.xlane.xlu0 %1226
  %v1228 = vlaneseq
  %v1229 = vshrl.u32 %v1228, 7
  %v1230 = vsub.s32 3, %v1229
  %v1231 = vrot.slane %v1148, %v1230
  %v1232 = vlaneseq
  %v1233 = vshrl.u32 %v1232, 7
  %v1234 = vsub.s32 7, %v1233
  %v1235 = vrot.slane %v1148, %v1234
  %v1238 = vlaneseq
  %v1239 = vshrl.u32 %v1238, 7
  %v1240 = vsub.s32 3, %v1239
  %v1241 = vrot.slane %v1231, %v1240
  %v1242 = vlaneseq
  %v1243 = vshrl.u32 %v1242, 7
  %v1244 = vsub.s32 3, %v1243
  %v1245 = vrot.slane %v1235, %v1244
  %v1246 = vmul.f32 %v1146, %v1241
  %v1247 = vmul.f32 %v1147, %v1245
  %vm1248 = vcmask 1047558
  %v1249 = vsel %vm1248, %v1246, 0.0
  %v1250 = vsel %vm1248, %v1247, 0.0
  %v1251 = vadd.f32 %v1249, %v1250
  %1252 = vadd.xlane.f32.xlu0 %v1251
  %v1253 = vpop.xlane.xlu0 %1252
  %v1255 = vrot.slane %v1201, 2
  %v1257 = vadd.f32 %v1175, %v1255
  %v1259 = vrot.slane %v1227, 4
  %v1261 = vadd.f32 %v1257, %v1259
  %v1263 = vrot.slane %v1253, 6
  %v1265 = vadd.f32 %v1261, %v1263
  %v1266 = vsub.f32 0.0, %v1265
  %v1267 = vmul.f32 %v1266, 1.442695
  %v1268 = vpow.pop %v1267
  %v1269 = vadd.f32 %v1268, 1.0
  %v1270 = vrcp.pop %v1269
  %v1271 = vmul.f32 1.0, %v1270
  %vm1272 = vcmask 1024
  %1273 = vst.msk [vmem:[%s9] sm:$0x3] %vm1272, %v1271
  // Predicated region
  $region38: #{lapgan_discriminator_level2.1} parent=0 // pred_check
    _
  $region39: #{lapgan_discriminator_level2.1} parent=0 // pred_check_branch
    %1275 = sbr.rel (0) target = $region41
  $region40: #{lapgan_discriminator_level2.1} parent=0 // pred_region
    _
  $region41: #{lapgan_discriminator_level2.1} parent=0 // pred_fallthru
    _
  // Predicated region
  $region42: #{lapgan_discriminator_level2.1} parent=0 // pred_check
    _
  $region43: #{lapgan_discriminator_level2.1} parent=0 // pred_check_branch
    %1277 = sbr.rel (0) target = $region45
  $region44: #{lapgan_discriminator_level2.1} parent=0 // pred_region
    _
  $region45: #{lapgan_discriminator_level2.1} parent=0 // pred_fallthru
    _

</llo_original>
